<compile_context>
chip_gen: v5e
topology: v5e:2x2
jax: 0.10.0
libtpu: 0.0.40
codegen_flags: <defaults>
</compile_context>

<pallas_src>
import jax
import jax.numpy as jnp
from jax import lax
from jax.experimental import pallas as pl
from jax.experimental.pallas import tpu as pltpu

NEG_SLOPE = 0.01   # nn.LeakyReLU() default
BN_EPS = 1e-5      # nn.BatchNorm1d default


def _leaky(x):
    return jnp.where(x >= 0, x, NEG_SLOPE * x)


def conv_attention_kernel(x_ref, w1p_ref, b1_ref, w2_ref, b2_ref, e_ref, o_ref):
    """One grid step = one batch tile, lane-dense (bt, C*L) slabs.

    x_ref   : (bt, C*L)     input slab (channel-major flatten of (C, L))
    w1p_ref : (C*L, inter)  fc1 weight with mean-pool AND eval-BN scale folded in
    b1_ref  : (1, inter)    fc1 folded BN bias
    w2_ref  : (inter, C)    fc2 weight with eval-BN scale folded in
    b2_ref  : (1, C)        fc2 folded BN bias
    e_ref   : (C, C*L)      0/1 channel -> lane-segment expansion matrix
    o_ref   : (bt, C*L)
    """
    # fc1 (mean-pool + 1x1 conv + BN, all folded) + LeakyReLU.  x is consumed by the dot;
    # the slab value is not kept live across the fc chain.
    z = jnp.dot(x_ref[...].astype(jnp.float32), w1p_ref[...],
                preferred_element_type=jnp.float32) + b1_ref[...]
    z = _leaky(z)                                                   # (bt, inter)

    # fc2 (1x1 conv + BN folded) + LeakyReLU
    z = jnp.dot(z, w2_ref[...], preferred_element_type=jnp.float32) + b2_ref[...]
    z = _leaky(z)                                                   # (bt, C)

    gate = jax.nn.sigmoid(z)                                        # (bt, C)

    # Expand the per-channel gate over its L lanes (exact: E entries are 0/1) and apply.
    gate_full = jnp.dot(gate, e_ref[...], preferred_element_type=jnp.float32)  # (bt, C*L)
    o_ref[...] = (x_ref[...].astype(jnp.float32) * gate_full).astype(o_ref.dtype)


def _fold_bn(gamma, beta, mean, var):
    scale = gamma / jnp.sqrt(var + BN_EPS)
    bias = beta - mean * scale
    return scale, bias


def _vmem_plan():
    """Pick (slab budget, scoped VMEM limit) from the chip's physical VMEM, conservatively."""
    try:
        phys = getattr(pltpu.get_tpu_info(), "vmem_capacity_bytes", 64 << 20)
    except Exception:
        phys = 64 << 20                              # assume the smallest (v7x per-core)
    limit = int(min(phys // 2, 48 << 20))            # 48 MiB on v5e/v6e, 32 MiB on v7x
    slab_budget = int(max(limit - (8 << 20), 8 << 20))   # headroom for weights / metadata
    return slab_budget, limit


def _pick_batch_tile(n, cl, itemsize, inter, c, slab_budget):
    """Batch tile: divisor of n (no pad/slice HBM round trip), sublane-aligned when possible,
    double-buffered in+out slabs plus weights within the VMEM budget, and >= 2 grid steps
    once n is large enough that v7x's two TensorCores should both get work."""
    cl_pad = -(-cl // 128) * 128                     # lane padding of the slab in VMEM
    per_sample = 2 * 2 * cl_pad * itemsize           # (in + out) x double-buffering
    weight_bytes = 2 * 4 * (cl_pad * inter + inter * c + c * cl_pad + inter + c)
    cap = max(1, int((slab_budget - weight_bytes) // per_sample))
    if n >= 16:
        cap = min(cap, -(-n // 2))                   # guarantee >= 2 grid steps (v7x megacore)
    best = None
    for bt in range(min(cap, n), 0, -1):
        if n % bt:
            continue
        if bt % 8 == 0 or bt == n:                   # sublane-aligned or full-extent block
            return bt
        if best is None:
            best = bt                                # ragged-but-legal fallback
    return best if best is not None else 1


def conv_attention_forward(x, params):
    """x: (N, C, L) -> (N, C, L); matches PyTorch ConvAttention with eval-mode BatchNorm."""
    n, c, l = x.shape
    cl = c * l
    inter = params["w_fc1"].shape[0]
    itemsize = x.dtype.itemsize

    # --- glue: fold eval-mode BN into the 1x1-conv weights / single bias vectors ---
    s1, b1v = _fold_bn(params["bnf1_g"], params["bnf1_b"], params["bnf1_m"], params["bnf1_v"])
    s2, b2v = _fold_bn(params["bnf2_g"], params["bnf2_b"], params["bnf2_m"], params["bnf2_v"])
    w1 = params["w_fc1"][:, :, 0].T * s1[None, :]                    # (C, inter)
    w2 = (params["w_fc2"][:, :, 0].T * s2[None, :]).astype(jnp.float32)   # (inter, C)
    # Fold the mean-pool into fc1:  (x @ P) @ w1 == x @ (P @ w1),  P[c*L+j, c] = 1/L.
    w1p = jnp.repeat(w1 * (1.0 / l), l, axis=0).astype(jnp.float32)  # (C*L, inter)
    b1 = b1v[None, :].astype(jnp.float32)                            # (1, inter)
    b2 = b2v[None, :].astype(jnp.float32)                            # (1, C)
    # Per-channel gate -> per-element lanes expansion matrix (exact 0/1 entries).
    e = jnp.repeat(jnp.eye(c, dtype=jnp.float32), l, axis=1)         # (C, C*L)

    # Lane-dense view of x: a free reshape (contiguous), no extra HBM traffic.
    x2 = x.reshape(n, cl)

    slab_budget, vmem_limit = _vmem_plan()
    bt = _pick_batch_tile(n, cl, itemsize, inter, c, slab_budget)
    grid = (n // bt,)

    full = lambda shape: pl.BlockSpec(shape, lambda i: tuple(0 for _ in shape))

    cost = pl.CostEstimate(
        flops=int(2 * n * cl * inter + 2 * n * inter * c + 2 * n * c * cl + 4 * n * cl),
        transcendentals=int(n * c),
        bytes_accessed=int(2 * n * cl * itemsize
                           + 4 * (cl * inter + inter * c + c * cl + inter + c)),
    )

    out = pl.pallas_call(
        conv_attention_kernel,
        out_shape=jax.ShapeDtypeStruct((n, cl), x.dtype),
        grid_spec=pltpu.PrefetchScalarGridSpec(
            num_scalar_prefetch=0,
            grid=grid,
            in_specs=[
                pl.BlockSpec((bt, cl), lambda i: (i, 0)),
                # Constant block indices below: Pallas fetches these once (no per-step DMA).
                full((cl, inter)),
                full((1, inter)),
                full((inter, c)),
                full((1, c)),
                full((c, cl)),
            ],
            out_specs=pl.BlockSpec((bt, cl), lambda i: (i, 0)),
        ),
        compiler_params=pltpu.CompilerParams(
            dimension_semantics=("parallel",),
            vmem_limit_bytes=vmem_limit,
        ),
        cost_estimate=cost,
    )(x2, w1p, b1, w2, b2, e)

    return out.reshape(n, c, l)


# ---------------- pure-JAX reference (for verification) ----------------
def ref_forward(x, params):
    def bn_act(y, g, b, m, v):
        y = (y - m[None, :, None]) / jnp.sqrt(v[None, :, None] + BN_EPS)
        y = y * g[None, :, None] + b[None, :, None]
        return jnp.where(y >= 0, y, NEG_SLOPE * y)

    dn = ("NCH", "OIH", "NCH")
    pooled = jnp.mean(x, axis=2, keepdims=True)                              # (N, C, 1)
    z = lax.conv_general_dilated(pooled, params["w_fc1"], (1,), ((0, 0),), dimension_numbers=dn)
    z = bn_act(z, params["bnf1_g"], params["bnf1_b"], params["bnf1_m"], params["bnf1_v"])
    z = lax.conv_general_dilated(z, params["w_fc2"], (1,), ((0, 0),), dimension_numbers=dn)
    z = bn_act(z, params["bnf2_g"], params["bnf2_b"], params["bnf2_m"], params["bnf2_v"])
    return jax.nn.sigmoid(z) * x          # expand_as requires channels == in_channels


def init_params(key, in_channels, channels, reduction_factor=4):
    inter = max(in_channels // reduction_factor, 16)
    keys = jax.random.split(key, 10)
    f32 = jnp.float32
    return {
        # fc1: Conv1d(in_channels, inter, 1, bias=False) + BN
        "w_fc1": 0.1 * jax.random.normal(keys[0], (inter, in_channels, 1), f32),
        "bnf1_g": 0.8 + 0.4 * jax.random.uniform(keys[1], (inter,), f32),
        "bnf1_b": 0.1 * jax.random.normal(keys[2], (inter,), f32),
        "bnf1_m": 0.1 * jax.random.normal(keys[3], (inter,), f32),
        "bnf1_v": 0.5 + jax.random.uniform(keys[4], (inter,), f32),
        # fc2: Conv1d(inter, channels, 1, bias=False) + BN
        "w_fc2": 0.1 * jax.random.normal(keys[5], (channels, inter, 1), f32),
        "bnf2_g": 0.8 + 0.4 * jax.random.uniform(keys[6], (channels,), f32),
        "bnf2_b": 0.1 * jax.random.normal(keys[7], (channels,), f32),
        "bnf2_m": 0.1 * jax.random.normal(keys[8], (channels,), f32),
        "bnf2_v": 0.5 + jax.random.uniform(keys[9], (channels,), f32),
    }


if __name__ == "__main__":
    # ConvAttention(in_channels=32, channels=32): y.expand_as(x) requires channels == in_channels.
    N, C, L = 4, 32, 64          # C*L = 2048 -> lane-dense slab
    key = jax.random.PRNGKey(0)
    kx, kp = jax.random.split(key)
    x = jax.random.normal(kx, (N, C, L), jnp.float32)
    params = init_params(kp, C, C)

    out = jax.block_until_ready(conv_attention_forward(x, params))
    ref = jax.block_until_ready(ref_forward(x, params))

    assert out.shape == (N, C, L), out.shape
    assert jnp.allclose(out, ref, atol=1e-4, rtol=1e-4), float(jnp.max(jnp.abs(out - ref)))
    print("KERNEL_OK")
</pallas_src>

<mosaic_0001>
module attributes {stable_mosaic.version = 11 : i64} {
  func.func @conv_attention_kernel(%arg0: i32, %arg1: memref<4x2048xf32, #tpu.memory_space<vmem>>, %arg2: memref<2048x16xf32, #tpu.memory_space<vmem>>, %arg3: memref<1x16xf32, #tpu.memory_space<vmem>>, %arg4: memref<16x32xf32, #tpu.memory_space<vmem>>, %arg5: memref<1x32xf32, #tpu.memory_space<vmem>>, %arg6: memref<32x2048xf32, #tpu.memory_space<vmem>>, %arg7: memref<4x2048xf32, #tpu.memory_space<vmem>>) attributes {dimension_semantics = [#tpu.dimension_semantics<parallel>], iteration_bounds = array<i64: 1>, scalar_prefetch = 0 : i64, scratch_operands = 0 : i64, tpu.core_type = #tpu.core_type<tc>, window_params = [{transform_indices = @transform_0, window_bounds = array<i64: 4, 2048>}, {pipeline_mode = #tpu.pipeline_mode<synchronous>, transform_indices = @transform_1, window_bounds = array<i64: 2048, 16>}, {pipeline_mode = #tpu.pipeline_mode<synchronous>, transform_indices = @transform_2, window_bounds = array<i64: 1, 16>}, {pipeline_mode = #tpu.pipeline_mode<synchronous>, transform_indices = @transform_3, window_bounds = array<i64: 16, 32>}, {pipeline_mode = #tpu.pipeline_mode<synchronous>, transform_indices = @transform_4, window_bounds = array<i64: 1, 32>}, {pipeline_mode = #tpu.pipeline_mode<synchronous>, transform_indices = @transform_5, window_bounds = array<i64: 32, 2048>}, {transform_indices = @transform_6, window_bounds = array<i64: 4, 2048>}]} {
    %c0 = arith.constant 0 : index
    %c0_0 = arith.constant 0 : index
    %0 = vector.load %arg1[%c0, %c0_0] : memref<4x2048xf32, #tpu.memory_space<vmem>>, vector<4x2048xf32>
    %c0_1 = arith.constant 0 : index
    %c0_2 = arith.constant 0 : index
    %1 = vector.load %arg2[%c0_1, %c0_2] : memref<2048x16xf32, #tpu.memory_space<vmem>>, vector<2048x16xf32>
    %cst = arith.constant dense<0.000000e+00> : vector<4x16xf32>
    %2 = tpu.matmul %0, %1, %cst {dimension_numbers = #tpu.dot_dimension_numbers<[1], [0], [0], [1], [0, 0, 1, 1], [], []>} : vector<4x2048xf32>, vector<2048x16xf32>, vector<4x16xf32> -> vector<4x16xf32>
    %c0_3 = arith.constant 0 : index
    %c0_4 = arith.constant 0 : index
    %3 = vector.load %arg3[%c0_3, %c0_4] : memref<1x16xf32, #tpu.memory_space<vmem>>, vector<1x16xf32>
    %4 = vector.broadcast %3 : vector<1x16xf32> to vector<4x16xf32>
    %5 = arith.addf %2, %4 : vector<4x16xf32>
    %cst_5 = arith.constant 0.000000e+00 : f32
    %6 = vector.broadcast %cst_5 : f32 to vector<4x16xf32>
    %7 = arith.cmpf oge, %5, %6 : vector<4x16xf32>
    %cst_6 = arith.constant 0.00999999977 : f32
    %8 = vector.broadcast %cst_6 : f32 to vector<4x16xf32>
    %9 = arith.mulf %8, %5 : vector<4x16xf32>
    %10 = arith.select %7, %5, %9 : vector<4x16xi1>, vector<4x16xf32>
    %c0_7 = arith.constant 0 : index
    %c0_8 = arith.constant 0 : index
    %11 = vector.load %arg4[%c0_7, %c0_8] : memref<16x32xf32, #tpu.memory_space<vmem>>, vector<16x32xf32>
    %cst_9 = arith.constant dense<0.000000e+00> : vector<4x32xf32>
    %12 = tpu.matmul %10, %11, %cst_9 {dimension_numbers = #tpu.dot_dimension_numbers<[1], [0], [0], [1], [0, 0, 1, 1], [], []>} : vector<4x16xf32>, vector<16x32xf32>, vector<4x32xf32> -> vector<4x32xf32>
    %c0_10 = arith.constant 0 : index
    %c0_11 = arith.constant 0 : index
    %13 = vector.load %arg5[%c0_10, %c0_11] : memref<1x32xf32, #tpu.memory_space<vmem>>, vector<1x32xf32>
    %14 = vector.broadcast %13 : vector<1x32xf32> to vector<4x32xf32>
    %15 = arith.addf %12, %14 : vector<4x32xf32>
    %cst_12 = arith.constant 0.000000e+00 : f32
    %16 = vector.broadcast %cst_12 : f32 to vector<4x32xf32>
    %17 = arith.cmpf oge, %15, %16 : vector<4x32xf32>
    %cst_13 = arith.constant 0.00999999977 : f32
    %18 = vector.broadcast %cst_13 : f32 to vector<4x32xf32>
    %19 = arith.mulf %18, %15 : vector<4x32xf32>
    %20 = arith.select %17, %15, %19 : vector<4x32xi1>, vector<4x32xf32>
    %21 = arith.negf %20 : vector<4x32xf32>
    %22 = math.exp %21 : vector<4x32xf32>
    %cst_14 = arith.constant 1.000000e+00 : f32
    %23 = vector.broadcast %cst_14 : f32 to vector<4x32xf32>
    %24 = arith.addf %23, %22 : vector<4x32xf32>
    %25 = arith.divf %23, %24 : vector<4x32xf32>
    %c0_15 = arith.constant 0 : index
    %c0_16 = arith.constant 0 : index
    %26 = vector.load %arg6[%c0_15, %c0_16] : memref<32x2048xf32, #tpu.memory_space<vmem>>, vector<32x2048xf32>
    %cst_17 = arith.constant dense<0.000000e+00> : vector<4x2048xf32>
    %27 = tpu.matmul %25, %26, %cst_17 {dimension_numbers = #tpu.dot_dimension_numbers<[1], [0], [0], [1], [0, 0, 1, 1], [], []>} : vector<4x32xf32>, vector<32x2048xf32>, vector<4x2048xf32> -> vector<4x2048xf32>
    %c0_18 = arith.constant 0 : index
    %c0_19 = arith.constant 0 : index
    %28 = vector.load %arg1[%c0_18, %c0_19] : memref<4x2048xf32, #tpu.memory_space<vmem>>, vector<4x2048xf32>
    %29 = arith.mulf %28, %27 : vector<4x2048xf32>
    %c0_20 = arith.constant 0 : index
    %c0_21 = arith.constant 0 : index
    %30 = vector.load %arg7[%c0_20, %c0_21] : memref<4x2048xf32, #tpu.memory_space<vmem>>, vector<4x2048xf32>
    tpu.vector_store %arg7[%c0_20, %c0_21], %29 {strides = array<i32>} : memref<4x2048xf32, #tpu.memory_space<vmem>>, vector<4x2048xf32>,
    return
  }
  func.func @transform_0(%arg0: i32) -> (i32, i32) {
    %c0_i32 = arith.constant 0 : i32
    %c0_i32_0 = arith.constant 0 : i32
    return %arg0, %c0_i32 : i32, i32
  }
  func.func @transform_1(%arg0: i32) -> (i32, i32) {
    %c0_i32 = arith.constant 0 : i32
    %c0_i32_0 = arith.constant 0 : i32
    %c0_i32_1 = arith.constant 0 : i32
    return %c0_i32, %c0_i32_0 : i32, i32
  }
  func.func @transform_2(%arg0: i32) -> (i32, i32) {
    %c0_i32 = arith.constant 0 : i32
    %c0_i32_0 = arith.constant 0 : i32
    %c0_i32_1 = arith.constant 0 : i32
    return %c0_i32, %c0_i32_0 : i32, i32
  }
  func.func @transform_3(%arg0: i32) -> (i32, i32) {
    %c0_i32 = arith.constant 0 : i32
    %c0_i32_0 = arith.constant 0 : i32
    %c0_i32_1 = arith.constant 0 : i32
    return %c0_i32, %c0_i32_0 : i32, i32
  }
  func.func @transform_4(%arg0: i32) -> (i32, i32) {
    %c0_i32 = arith.constant 0 : i32
    %c0_i32_0 = arith.constant 0 : i32
    %c0_i32_1 = arith.constant 0 : i32
    return %c0_i32, %c0_i32_0 : i32, i32
  }
  func.func @transform_5(%arg0: i32) -> (i32, i32) {
    %c0_i32 = arith.constant 0 : i32
    %c0_i32_0 = arith.constant 0 : i32
    %c0_i32_1 = arith.constant 0 : i32
    return %c0_i32, %c0_i32_0 : i32, i32
  }
  func.func @transform_6(%arg0: i32) -> (i32, i32) {
    %c0_i32 = arith.constant 0 : i32
    %c0_i32_0 = arith.constant 0 : i32
    return %arg0, %c0_i32 : i32, i32
  }
}

</mosaic_0001>

<llo_original>
// kernel: tpu_custom_call.1
$region0: #{tpu_custom_call.1}
  #allocation0 [shape = 'u32[]', space=smem, size = 0x4, offset = 0x4, fixed_abs, tag = 'smem constant byte address 0x4 - core index']
  #allocation1 [shape = 'u32[72,128]{1,0:T(1,128)}', space=vmem, size = 0x9000, scoped, tag = 'internal scratch']
  %s0 = inlined_call_operand.vmem [shape: f32[4,2048], index: 0, kind: input, shape index: {}]
  %s1 = inlined_call_operand.vmem [shape: f32[2048,16], index: 1, kind: input, shape index: {}]
  %s2 = inlined_call_operand.vmem [shape: f32[1,16], index: 2, kind: input, shape index: {}]
  %s3 = inlined_call_operand.vmem [shape: f32[16,32], index: 3, kind: input, shape index: {}]
  %s4 = inlined_call_operand.vmem [shape: f32[1,32], index: 4, kind: input, shape index: {}]
  %s5 = inlined_call_operand.vmem [shape: f32[32,2048], index: 5, kind: input, shape index: {}]
  %s6 = inlined_call_operand.hbm [shape: f32[4,2048], index: 6, kind: output, shape index: {}]
  %s7 = sld [smem:[#allocation0]]
  $region34: #{tpu_custom_call.1} parent=0
    _
  %s9 = ssub.s32 1, %s7
  %s10 = scalar_select 0, %s9, %s7
  $region1: #{tpu_custom_call.1} parent=0
    #allocation2 [shape = 'u8[32768]{0}', space=vmem, size = 0x8000, scoped, tag = 'output window, operand 0, single buffered']
    #allocation3 [shape = 's32[1]{0}', space=sflag, size = 0x4, scoped, tag = 'scoped memory for tpu_custom_call.1']
    %11 = vsyncpa [#allocation3], 0
    // Predicated region
    $region2: #{tpu_custom_call.1} parent=1 // pred_check
      _
    $region3: #{tpu_custom_call.1} parent=1 // pred_check_branch
      %13 = sbr.rel (0) target = $region5
    $region4: #{tpu_custom_call.1} parent=1 // pred_region
      _
    $region5: #{tpu_custom_call.1} parent=1 // pred_fallthru
      _
    // Predicated region
    $region6: #{tpu_custom_call.1} parent=1 // pred_check
      _
    $region7: #{tpu_custom_call.1} parent=1 // pred_check_branch
      %15 = sbr.rel (0) target = $region9
    $region8: #{tpu_custom_call.1} parent=1 // pred_region
      _
    $region9: #{tpu_custom_call.1} parent=1 // pred_fallthru
      _
    // Predicated region
    $region10: #{tpu_custom_call.1} parent=1 // pred_check
      _
    $region11: #{tpu_custom_call.1} parent=1 // pred_check_branch
      %17 = sbr.rel (0) target = $region13
    $region12: #{tpu_custom_call.1} parent=1 // pred_region
      _
    $region13: #{tpu_custom_call.1} parent=1 // pred_fallthru
      _
    // Predicated region
    $region14: #{tpu_custom_call.1} parent=1 // pred_check
      _
    $region15: #{tpu_custom_call.1} parent=1 // pred_check_branch
      %19 = sbr.rel (0) target = $region17
    $region16: #{tpu_custom_call.1} parent=1 // pred_region
      _
    $region17: #{tpu_custom_call.1} parent=1 // pred_fallthru
      _
    // Predicated region
    $region18: #{tpu_custom_call.1} parent=1 // pred_check
      _
    $region19: #{tpu_custom_call.1} parent=1 // pred_check_branch
      %21 = sbr.rel (0) target = $region21
    $region20: #{tpu_custom_call.1} parent=1 // pred_region
      _
    $region21: #{tpu_custom_call.1} parent=1 // pred_fallthru
      _
    // Predicated region
    $region22: #{tpu_custom_call.1} parent=1 // pred_check
      _
    $region23: #{tpu_custom_call.1} parent=1 // pred_check_branch
      %23 = sbr.rel (0) target = $region25
    $region24: #{tpu_custom_call.1} parent=1 // pred_region
      _
    $region25: #{tpu_custom_call.1} parent=1 // pred_fallthru
      _
    %v24 = vld [vmem:[%s0] sm:$0xff]
    %v25 = vld [vmem:[%s0 + $0x8] sm:$0xff]
    %v26 = vld [vmem:[%s0 + $0x10] sm:$0xff]
    %v27 = vld [vmem:[%s0 + $0x18] sm:$0xff]
    %v28 = vld [vmem:[%s0 + $0x20] sm:$0xff]
    %v29 = vld [vmem:[%s0 + $0x28] sm:$0xff]
    %v30 = vld [vmem:[%s0 + $0x30] sm:$0xff]
    %v31 = vld [vmem:[%s0 + $0x38] sm:$0xff]
    %v32 = vld [vmem:[%s1] sm:$0xff]
    %v33 = vld [vmem:[%s1 + $0x8] sm:$0xff]
    %v34 = vld [vmem:[%s1 + $0x10] sm:$0xff]
    %v35 = vld [vmem:[%s1 + $0x18] sm:$0xff]
    %v36 = vld [vmem:[%s1 + $0x20] sm:$0xff]
    %v37 = vld [vmem:[%s1 + $0x28] sm:$0xff]
    %v38 = vld [vmem:[%s1 + $0x30] sm:$0xff]
    %v39 = vld [vmem:[%s1 + $0x38] sm:$0xff]
    %v40 = vld [vmem:[%s1 + $0x40] sm:$0xff]
    %v41 = vld [vmem:[%s1 + $0x48] sm:$0xff]
    %v42 = vld [vmem:[%s1 + $0x50] sm:$0xff]
    %v43 = vld [vmem:[%s1 + $0x58] sm:$0xff]
    %v44 = vld [vmem:[%s1 + $0x60] sm:$0xff]
    %v45 = vld [vmem:[%s1 + $0x68] sm:$0xff]
    %v46 = vld [vmem:[%s1 + $0x70] sm:$0xff]
    %v47 = vld [vmem:[%s1 + $0x78] sm:$0xff]
    %v48 = vld [vmem:[%s1 + $0x80] sm:$0xff]
    %v49 = vld [vmem:[%s1 + $0x88] sm:$0xff]
    %v50 = vld [vmem:[%s1 + $0x90] sm:$0xff]
    %v51 = vld [vmem:[%s1 + $0x98] sm:$0xff]
    %v52 = vld [vmem:[%s1 + $0xa0] sm:$0xff]
    %v53 = vld [vmem:[%s1 + $0xa8] sm:$0xff]
    %v54 = vld [vmem:[%s1 + $0xb0] sm:$0xff]
    %v55 = vld [vmem:[%s1 + $0xb8] sm:$0xff]
    %v56 = vld [vmem:[%s1 + $0xc0] sm:$0xff]
    %v57 = vld [vmem:[%s1 + $0xc8] sm:$0xff]
    %v58 = vld [vmem:[%s1 + $0xd0] sm:$0xff]
    %v59 = vld [vmem:[%s1 + $0xd8] sm:$0xff]
    %v60 = vld [vmem:[%s1 + $0xe0] sm:$0xff]
    %v61 = vld [vmem:[%s1 + $0xe8] sm:$0xff]
    %v62 = vld [vmem:[%s1 + $0xf0] sm:$0xff]
    %v63 = vld [vmem:[%s1 + $0xf8] sm:$0xff]
    %v64 = vld [vmem:[%s1 + $0x100] sm:$0xff]
    %v65 = vld [vmem:[%s1 + $0x108] sm:$0xff]
    %v66 = vld [vmem:[%s1 + $0x110] sm:$0xff]
    %v67 = vld [vmem:[%s1 + $0x118] sm:$0xff]
    %v68 = vld [vmem:[%s1 + $0x120] sm:$0xff]
    %v69 = vld [vmem:[%s1 + $0x128] sm:$0xff]
    %v70 = vld [vmem:[%s1 + $0x130] sm:$0xff]
    %v71 = vld [vmem:[%s1 + $0x138] sm:$0xff]
    %v72 = vld [vmem:[%s1 + $0x140] sm:$0xff]
    %v73 = vld [vmem:[%s1 + $0x148] sm:$0xff]
    %v74 = vld [vmem:[%s1 + $0x150] sm:$0xff]
    %v75 = vld [vmem:[%s1 + $0x158] sm:$0xff]
    %v76 = vld [vmem:[%s1 + $0x160] sm:$0xff]
    %v77 = vld [vmem:[%s1 + $0x168] sm:$0xff]
    %v78 = vld [vmem:[%s1 + $0x170] sm:$0xff]
    %v79 = vld [vmem:[%s1 + $0x178] sm:$0xff]
    %v80 = vld [vmem:[%s1 + $0x180] sm:$0xff]
    %v81 = vld [vmem:[%s1 + $0x188] sm:$0xff]
    %v82 = vld [vmem:[%s1 + $0x190] sm:$0xff]
    %v83 = vld [vmem:[%s1 + $0x198] sm:$0xff]
    %v84 = vld [vmem:[%s1 + $0x1a0] sm:$0xff]
    %v85 = vld [vmem:[%s1 + $0x1a8] sm:$0xff]
    %v86 = vld [vmem:[%s1 + $0x1b0] sm:$0xff]
    %v87 = vld [vmem:[%s1 + $0x1b8] sm:$0xff]
    %v88 = vld [vmem:[%s1 + $0x1c0] sm:$0xff]
    %v89 = vld [vmem:[%s1 + $0x1c8] sm:$0xff]
    %v90 = vld [vmem:[%s1 + $0x1d0] sm:$0xff]
    %v91 = vld [vmem:[%s1 + $0x1d8] sm:$0xff]
    %v92 = vld [vmem:[%s1 + $0x1e0] sm:$0xff]
    %v93 = vld [vmem:[%s1 + $0x1e8] sm:$0xff]
    %v94 = vld [vmem:[%s1 + $0x1f0] sm:$0xff]
    %v95 = vld [vmem:[%s1 + $0x1f8] sm:$0xff]
    %v96 = vld [vmem:[%s1 + $0x200] sm:$0xff]
    %v97 = vld [vmem:[%s1 + $0x208] sm:$0xff]
    %v98 = vld [vmem:[%s1 + $0x210] sm:$0xff]
    %v99 = vld [vmem:[%s1 + $0x218] sm:$0xff]
    %v100 = vld [vmem:[%s1 + $0x220] sm:$0xff]
    %v101 = vld [vmem:[%s1 + $0x228] sm:$0xff]
    %v102 = vld [vmem:[%s1 + $0x230] sm:$0xff]
    %v103 = vld [vmem:[%s1 + $0x238] sm:$0xff]
    %v104 = vld [vmem:[%s1 + $0x240] sm:$0xff]
    %v105 = vld [vmem:[%s1 + $0x248] sm:$0xff]
    %v106 = vld [vmem:[%s1 + $0x250] sm:$0xff]
    %v107 = vld [vmem:[%s1 + $0x258] sm:$0xff]
    %v108 = vld [vmem:[%s1 + $0x260] sm:$0xff]
    %v109 = vld [vmem:[%s1 + $0x268] sm:$0xff]
    %v110 = vld [vmem:[%s1 + $0x270] sm:$0xff]
    %v111 = vld [vmem:[%s1 + $0x278] sm:$0xff]
    %v112 = vld [vmem:[%s1 + $0x280] sm:$0xff]
    %v113 = vld [vmem:[%s1 + $0x288] sm:$0xff]
    %v114 = vld [vmem:[%s1 + $0x290] sm:$0xff]
    %v115 = vld [vmem:[%s1 + $0x298] sm:$0xff]
    %v116 = vld [vmem:[%s1 + $0x2a0] sm:$0xff]
    %v117 = vld [vmem:[%s1 + $0x2a8] sm:$0xff]
    %v118 = vld [vmem:[%s1 + $0x2b0] sm:$0xff]
    %v119 = vld [vmem:[%s1 + $0x2b8] sm:$0xff]
    %v120 = vld [vmem:[%s1 + $0x2c0] sm:$0xff]
    %v121 = vld [vmem:[%s1 + $0x2c8] sm:$0xff]
    %v122 = vld [vmem:[%s1 + $0x2d0] sm:$0xff]
    %v123 = vld [vmem:[%s1 + $0x2d8] sm:$0xff]
    %v124 = vld [vmem:[%s1 + $0x2e0] sm:$0xff]
    %v125 = vld [vmem:[%s1 + $0x2e8] sm:$0xff]
    %v126 = vld [vmem:[%s1 + $0x2f0] sm:$0xff]
    %v127 = vld [vmem:[%s1 + $0x2f8] sm:$0xff]
    %v128 = vld [vmem:[%s1 + $0x300] sm:$0xff]
    %v129 = vld [vmem:[%s1 + $0x308] sm:$0xff]
    %v130 = vld [vmem:[%s1 + $0x310] sm:$0xff]
    %v131 = vld [vmem:[%s1 + $0x318] sm:$0xff]
    %v132 = vld [vmem:[%s1 + $0x320] sm:$0xff]
    %v133 = vld [vmem:[%s1 + $0x328] sm:$0xff]
    %v134 = vld [vmem:[%s1 + $0x330] sm:$0xff]
    %v135 = vld [vmem:[%s1 + $0x338] sm:$0xff]
    %v136 = vld [vmem:[%s1 + $0x340] sm:$0xff]
    %v137 = vld [vmem:[%s1 + $0x348] sm:$0xff]
    %v138 = vld [vmem:[%s1 + $0x350] sm:$0xff]
    %v139 = vld [vmem:[%s1 + $0x358] sm:$0xff]
    %v140 = vld [vmem:[%s1 + $0x360] sm:$0xff]
    %v141 = vld [vmem:[%s1 + $0x368] sm:$0xff]
    %v142 = vld [vmem:[%s1 + $0x370] sm:$0xff]
    %v143 = vld [vmem:[%s1 + $0x378] sm:$0xff]
    %v144 = vld [vmem:[%s1 + $0x380] sm:$0xff]
    %v145 = vld [vmem:[%s1 + $0x388] sm:$0xff]
    %v146 = vld [vmem:[%s1 + $0x390] sm:$0xff]
    %v147 = vld [vmem:[%s1 + $0x398] sm:$0xff]
    %v148 = vld [vmem:[%s1 + $0x3a0] sm:$0xff]
    %v149 = vld [vmem:[%s1 + $0x3a8] sm:$0xff]
    %v150 = vld [vmem:[%s1 + $0x3b0] sm:$0xff]
    %v151 = vld [vmem:[%s1 + $0x3b8] sm:$0xff]
    %v152 = vld [vmem:[%s1 + $0x3c0] sm:$0xff]
    %v153 = vld [vmem:[%s1 + $0x3c8] sm:$0xff]
    %v154 = vld [vmem:[%s1 + $0x3d0] sm:$0xff]
    %v155 = vld [vmem:[%s1 + $0x3d8] sm:$0xff]
    %v156 = vld [vmem:[%s1 + $0x3e0] sm:$0xff]
    %v157 = vld [vmem:[%s1 + $0x3e8] sm:$0xff]
    %v158 = vld [vmem:[%s1 + $0x3f0] sm:$0xff]
    %v159 = vld [vmem:[%s1 + $0x3f8] sm:$0xff]
    %v160 = vld [vmem:[%s1 + $0x400] sm:$0xff]
    %v161 = vld [vmem:[%s1 + $0x408] sm:$0xff]
    %v162 = vld [vmem:[%s1 + $0x410] sm:$0xff]
    %v163 = vld [vmem:[%s1 + $0x418] sm:$0xff]
    %v164 = vld [vmem:[%s1 + $0x420] sm:$0xff]
    %v165 = vld [vmem:[%s1 + $0x428] sm:$0xff]
    %v166 = vld [vmem:[%s1 + $0x430] sm:$0xff]
    %v167 = vld [vmem:[%s1 + $0x438] sm:$0xff]
    %v168 = vld [vmem:[%s1 + $0x440] sm:$0xff]
    %v169 = vld [vmem:[%s1 + $0x448] sm:$0xff]
    %v170 = vld [vmem:[%s1 + $0x450] sm:$0xff]
    %v171 = vld [vmem:[%s1 + $0x458] sm:$0xff]
    %v172 = vld [vmem:[%s1 + $0x460] sm:$0xff]
    %v173 = vld [vmem:[%s1 + $0x468] sm:$0xff]
    %v174 = vld [vmem:[%s1 + $0x470] sm:$0xff]
    %v175 = vld [vmem:[%s1 + $0x478] sm:$0xff]
    %v176 = vld [vmem:[%s1 + $0x480] sm:$0xff]
    %v177 = vld [vmem:[%s1 + $0x488] sm:$0xff]
    %v178 = vld [vmem:[%s1 + $0x490] sm:$0xff]
    %v179 = vld [vmem:[%s1 + $0x498] sm:$0xff]
    %v180 = vld [vmem:[%s1 + $0x4a0] sm:$0xff]
    %v181 = vld [vmem:[%s1 + $0x4a8] sm:$0xff]
    %v182 = vld [vmem:[%s1 + $0x4b0] sm:$0xff]
    %v183 = vld [vmem:[%s1 + $0x4b8] sm:$0xff]
    %v184 = vld [vmem:[%s1 + $0x4c0] sm:$0xff]
    %v185 = vld [vmem:[%s1 + $0x4c8] sm:$0xff]
    %v186 = vld [vmem:[%s1 + $0x4d0] sm:$0xff]
    %v187 = vld [vmem:[%s1 + $0x4d8] sm:$0xff]
    %v188 = vld [vmem:[%s1 + $0x4e0] sm:$0xff]
    %v189 = vld [vmem:[%s1 + $0x4e8] sm:$0xff]
    %v190 = vld [vmem:[%s1 + $0x4f0] sm:$0xff]
    %v191 = vld [vmem:[%s1 + $0x4f8] sm:$0xff]
    %v192 = vld [vmem:[%s1 + $0x500] sm:$0xff]
    %v193 = vld [vmem:[%s1 + $0x508] sm:$0xff]
    %v194 = vld [vmem:[%s1 + $0x510] sm:$0xff]
    %v195 = vld [vmem:[%s1 + $0x518] sm:$0xff]
    %v196 = vld [vmem:[%s1 + $0x520] sm:$0xff]
    %v197 = vld [vmem:[%s1 + $0x528] sm:$0xff]
    %v198 = vld [vmem:[%s1 + $0x530] sm:$0xff]
    %v199 = vld [vmem:[%s1 + $0x538] sm:$0xff]
    %v200 = vld [vmem:[%s1 + $0x540] sm:$0xff]
    %v201 = vld [vmem:[%s1 + $0x548] sm:$0xff]
    %v202 = vld [vmem:[%s1 + $0x550] sm:$0xff]
    %v203 = vld [vmem:[%s1 + $0x558] sm:$0xff]
    %v204 = vld [vmem:[%s1 + $0x560] sm:$0xff]
    %v205 = vld [vmem:[%s1 + $0x568] sm:$0xff]
    %v206 = vld [vmem:[%s1 + $0x570] sm:$0xff]
    %v207 = vld [vmem:[%s1 + $0x578] sm:$0xff]
    %v208 = vld [vmem:[%s1 + $0x580] sm:$0xff]
    %v209 = vld [vmem:[%s1 + $0x588] sm:$0xff]
    %v210 = vld [vmem:[%s1 + $0x590] sm:$0xff]
    %v211 = vld [vmem:[%s1 + $0x598] sm:$0xff]
    %v212 = vld [vmem:[%s1 + $0x5a0] sm:$0xff]
    %v213 = vld [vmem:[%s1 + $0x5a8] sm:$0xff]
    %v214 = vld [vmem:[%s1 + $0x5b0] sm:$0xff]
    %v215 = vld [vmem:[%s1 + $0x5b8] sm:$0xff]
    %v216 = vld [vmem:[%s1 + $0x5c0] sm:$0xff]
    %v217 = vld [vmem:[%s1 + $0x5c8] sm:$0xff]
    %v218 = vld [vmem:[%s1 + $0x5d0] sm:$0xff]
    %v219 = vld [vmem:[%s1 + $0x5d8] sm:$0xff]
    %v220 = vld [vmem:[%s1 + $0x5e0] sm:$0xff]
    %v221 = vld [vmem:[%s1 + $0x5e8] sm:$0xff]
    %v222 = vld [vmem:[%s1 + $0x5f0] sm:$0xff]
    %v223 = vld [vmem:[%s1 + $0x5f8] sm:$0xff]
    %v224 = vld [vmem:[%s1 + $0x600] sm:$0xff]
    %v225 = vld [vmem:[%s1 + $0x608] sm:$0xff]
    %v226 = vld [vmem:[%s1 + $0x610] sm:$0xff]
    %v227 = vld [vmem:[%s1 + $0x618] sm:$0xff]
    %v228 = vld [vmem:[%s1 + $0x620] sm:$0xff]
    %v229 = vld [vmem:[%s1 + $0x628] sm:$0xff]
    %v230 = vld [vmem:[%s1 + $0x630] sm:$0xff]
    %v231 = vld [vmem:[%s1 + $0x638] sm:$0xff]
    %v232 = vld [vmem:[%s1 + $0x640] sm:$0xff]
    %v233 = vld [vmem:[%s1 + $0x648] sm:$0xff]
    %v234 = vld [vmem:[%s1 + $0x650] sm:$0xff]
    %v235 = vld [vmem:[%s1 + $0x658] sm:$0xff]
    %v236 = vld [vmem:[%s1 + $0x660] sm:$0xff]
    %v237 = vld [vmem:[%s1 + $0x668] sm:$0xff]
    %v238 = vld [vmem:[%s1 + $0x670] sm:$0xff]
    %v239 = vld [vmem:[%s1 + $0x678] sm:$0xff]
    %v240 = vld [vmem:[%s1 + $0x680] sm:$0xff]
    %v241 = vld [vmem:[%s1 + $0x688] sm:$0xff]
    %v242 = vld [vmem:[%s1 + $0x690] sm:$0xff]
    %v243 = vld [vmem:[%s1 + $0x698] sm:$0xff]
    %v244 = vld [vmem:[%s1 + $0x6a0] sm:$0xff]
    %v245 = vld [vmem:[%s1 + $0x6a8] sm:$0xff]
    %v246 = vld [vmem:[%s1 + $0x6b0] sm:$0xff]
    %v247 = vld [vmem:[%s1 + $0x6b8] sm:$0xff]
    %v248 = vld [vmem:[%s1 + $0x6c0] sm:$0xff]
    %v249 = vld [vmem:[%s1 + $0x6c8] sm:$0xff]
    %v250 = vld [vmem:[%s1 + $0x6d0] sm:$0xff]
    %v251 = vld [vmem:[%s1 + $0x6d8] sm:$0xff]
    %v252 = vld [vmem:[%s1 + $0x6e0] sm:$0xff]
    %v253 = vld [vmem:[%s1 + $0x6e8] sm:$0xff]
    %v254 = vld [vmem:[%s1 + $0x6f0] sm:$0xff]
    %v255 = vld [vmem:[%s1 + $0x6f8] sm:$0xff]
    %v256 = vld [vmem:[%s1 + $0x700] sm:$0xff]
    %v257 = vld [vmem:[%s1 + $0x708] sm:$0xff]
    %v258 = vld [vmem:[%s1 + $0x710] sm:$0xff]
    %v259 = vld [vmem:[%s1 + $0x718] sm:$0xff]
    %v260 = vld [vmem:[%s1 + $0x720] sm:$0xff]
    %v261 = vld [vmem:[%s1 + $0x728] sm:$0xff]
    %v262 = vld [vmem:[%s1 + $0x730] sm:$0xff]
    %v263 = vld [vmem:[%s1 + $0x738] sm:$0xff]
    %v264 = vld [vmem:[%s1 + $0x740] sm:$0xff]
    %v265 = vld [vmem:[%s1 + $0x748] sm:$0xff]
    %v266 = vld [vmem:[%s1 + $0x750] sm:$0xff]
    %v267 = vld [vmem:[%s1 + $0x758] sm:$0xff]
    %v268 = vld [vmem:[%s1 + $0x760] sm:$0xff]
    %v269 = vld [vmem:[%s1 + $0x768] sm:$0xff]
    %v270 = vld [vmem:[%s1 + $0x770] sm:$0xff]
    %v271 = vld [vmem:[%s1 + $0x778] sm:$0xff]
    %v272 = vld [vmem:[%s1 + $0x780] sm:$0xff]
    %v273 = vld [vmem:[%s1 + $0x788] sm:$0xff]
    %v274 = vld [vmem:[%s1 + $0x790] sm:$0xff]
    %v275 = vld [vmem:[%s1 + $0x798] sm:$0xff]
    %v276 = vld [vmem:[%s1 + $0x7a0] sm:$0xff]
    %v277 = vld [vmem:[%s1 + $0x7a8] sm:$0xff]
    %v278 = vld [vmem:[%s1 + $0x7b0] sm:$0xff]
    %v279 = vld [vmem:[%s1 + $0x7b8] sm:$0xff]
    %v280 = vld [vmem:[%s1 + $0x7c0] sm:$0xff]
    %v281 = vld [vmem:[%s1 + $0x7c8] sm:$0xff]
    %v282 = vld [vmem:[%s1 + $0x7d0] sm:$0xff]
    %v283 = vld [vmem:[%s1 + $0x7d8] sm:$0xff]
    %v284 = vld [vmem:[%s1 + $0x7e0] sm:$0xff]
    %v285 = vld [vmem:[%s1 + $0x7e8] sm:$0xff]
    %v286 = vld [vmem:[%s1 + $0x7f0] sm:$0xff]
    %v287 = vld [vmem:[%s1 + $0x7f8] sm:$0xff]
    %v288 = vld [vmem:[%s2] sm:$0x1]
    %v290 = vperm.slane %v288, 0
    %300 = vst [vmem:[#allocation1] ss:$2 sm:$0xff] %v24
    %s301 = scalar_lea.vmem [#allocation1], 16
    %302 = vst [vmem:[%s301] ss:$2 sm:$0xff] %v25
    %s303 = scalar_lea.vmem [#allocation1], 32
    %304 = vst [vmem:[%s303] ss:$2 sm:$0xff] %v26
    %s305 = scalar_lea.vmem [#allocation1], 48
    %306 = vst [vmem:[%s305] ss:$2 sm:$0xff] %v27
    %v307 = vld.sshfl [vmem:[#allocation1] sm:$0xff pattern:$0x75316420]
    %v308 = vld.sshfl [vmem:[#allocation1 + $0x8] sm:$0xff pattern:$0x75316420]
    %v309 = vld.sshfl [vmem:[#allocation1 + $0x10] sm:$0xff pattern:$0x75316420]
    %v310 = vld.sshfl [vmem:[#allocation1 + $0x18] sm:$0xff pattern:$0x75316420]
    %v311 = vld.sshfl [vmem:[#allocation1 + $0x20] sm:$0xff pattern:$0x75316420]
    %v312 = vld.sshfl [vmem:[#allocation1 + $0x28] sm:$0xff pattern:$0x75316420]
    %v313 = vld.sshfl [vmem:[#allocation1 + $0x30] sm:$0xff pattern:$0x75316420]
    %v314 = vld.sshfl [vmem:[#allocation1 + $0x38] sm:$0xff pattern:$0x75316420]
    %315 = vst [vmem:[#allocation1] ss:$2 sm:$0xff] %v28
    %316 = vst [vmem:[%s301] ss:$2 sm:$0xff] %v29
    %317 = vst [vmem:[%s303] ss:$2 sm:$0xff] %v30
    %318 = vst [vmem:[%s305] ss:$2 sm:$0xff] %v31
    %v319 = vld.sshfl [vmem:[#allocation1] sm:$0xff pattern:$0x75316420]
    %v320 = vld.sshfl [vmem:[#allocation1 + $0x8] sm:$0xff pattern:$0x75316420]
    %v321 = vld.sshfl [vmem:[#allocation1 + $0x10] sm:$0xff pattern:$0x75316420]
    %v322 = vld.sshfl [vmem:[#allocation1 + $0x18] sm:$0xff pattern:$0x75316420]
    %v323 = vld.sshfl [vmem:[#allocation1 + $0x20] sm:$0xff pattern:$0x75316420]
    %v324 = vld.sshfl [vmem:[#allocation1 + $0x28] sm:$0xff pattern:$0x75316420]
    %v325 = vld.sshfl [vmem:[#allocation1 + $0x30] sm:$0xff pattern:$0x75316420]
    %v326 = vld.sshfl [vmem:[#allocation1 + $0x38] sm:$0xff pattern:$0x75316420]
    %343 = vmatpush.msra.mxu0 %v47
    %344 = vmatpush.msra.mxu0 %v46
    %345 = vmatpush.msra.mxu0 %v45
    %346 = vmatpush.msra.mxu0 %v44
    %347 = vmatpush.msra.mxu0 %v43
    %348 = vmatpush.msra.mxu0 %v42
    %349 = vmatpush.msra.mxu0 %v41
    %350 = vmatpush.msra.mxu0 %v40
    %351 = vmatpush.msra.mxu0 %v39
    %352 = vmatpush.msra.mxu0 %v38
    %353 = vmatpush.msra.mxu0 %v37
    %354 = vmatpush.msra.mxu0 %v36
    %355 = vmatpush.msra.mxu0 %v35
    %356 = vmatpush.msra.mxu0 %v34
    %357 = vmatpush.msra.mxu0 %v33
    %358 = vmatpush.msra.mxu0 %v32
    %359 = vmatmul.f32.gmra.mxu0 %v307
    %v360 = vpop.f32.mrf.mxu0
    %v361 = vadd.f32 %v290, %v360
    %362 = vdwg.mxu0
    %363 = vmatpush.msra.mxu0 %v63
    %364 = vmatpush.msra.mxu0 %v62
    %365 = vmatpush.msra.mxu0 %v61
    %366 = vmatpush.msra.mxu0 %v60
    %367 = vmatpush.msra.mxu0 %v59
    %368 = vmatpush.msra.mxu0 %v58
    %369 = vmatpush.msra.mxu0 %v57
    %370 = vmatpush.msra.mxu0 %v56
    %371 = vmatpush.msra.mxu0 %v55
    %372 = vmatpush.msra.mxu0 %v54
    %373 = vmatpush.msra.mxu0 %v53
    %374 = vmatpush.msra.mxu0 %v52
    %375 = vmatpush.msra.mxu0 %v51
    %376 = vmatpush.msra.mxu0 %v50
    %377 = vmatpush.msra.mxu0 %v49
    %378 = vmatpush.msra.mxu0 %v48
    %379 = vmatmul.f32.gmra.mxu0 %v308
    %v380 = vpop.f32.mrf.mxu0
    %v381 = vadd.f32 %v361, %v380
    %382 = vdwg.mxu0
    %383 = vmatpush.msra.mxu0 %v79
    %384 = vmatpush.msra.mxu0 %v78
    %385 = vmatpush.msra.mxu0 %v77
    %386 = vmatpush.msra.mxu0 %v76
    %387 = vmatpush.msra.mxu0 %v75
    %388 = vmatpush.msra.mxu0 %v74
    %389 = vmatpush.msra.mxu0 %v73
    %390 = vmatpush.msra.mxu0 %v72
    %391 = vmatpush.msra.mxu0 %v71
    %392 = vmatpush.msra.mxu0 %v70
    %393 = vmatpush.msra.mxu0 %v69
    %394 = vmatpush.msra.mxu0 %v68
    %395 = vmatpush.msra.mxu0 %v67
    %396 = vmatpush.msra.mxu0 %v66
    %397 = vmatpush.msra.mxu0 %v65
    %398 = vmatpush.msra.mxu0 %v64
    %399 = vmatmul.f32.gmra.mxu0 %v309
    %v400 = vpop.f32.mrf.mxu0
    %v401 = vadd.f32 %v381, %v400
    %402 = vdwg.mxu0
    %403 = vmatpush.msra.mxu0 %v95
    %404 = vmatpush.msra.mxu0 %v94
    %405 = vmatpush.msra.mxu0 %v93
    %406 = vmatpush.msra.mxu0 %v92
    %407 = vmatpush.msra.mxu0 %v91
    %408 = vmatpush.msra.mxu0 %v90
    %409 = vmatpush.msra.mxu0 %v89
    %410 = vmatpush.msra.mxu0 %v88
    %411 = vmatpush.msra.mxu0 %v87
    %412 = vmatpush.msra.mxu0 %v86
    %413 = vmatpush.msra.mxu0 %v85
    %414 = vmatpush.msra.mxu0 %v84
    %415 = vmatpush.msra.mxu0 %v83
    %416 = vmatpush.msra.mxu0 %v82
    %417 = vmatpush.msra.mxu0 %v81
    %418 = vmatpush.msra.mxu0 %v80
    %419 = vmatmul.f32.gmra.mxu0 %v310
    %v420 = vpop.f32.mrf.mxu0
    %v421 = vadd.f32 %v401, %v420
    %422 = vdwg.mxu0
    %423 = vmatpush.msra.mxu0 %v111
    %424 = vmatpush.msra.mxu0 %v110
    %425 = vmatpush.msra.mxu0 %v109
    %426 = vmatpush.msra.mxu0 %v108
    %427 = vmatpush.msra.mxu0 %v107
    %428 = vmatpush.msra.mxu0 %v106
    %429 = vmatpush.msra.mxu0 %v105
    %430 = vmatpush.msra.mxu0 %v104
    %431 = vmatpush.msra.mxu0 %v103
    %432 = vmatpush.msra.mxu0 %v102
    %433 = vmatpush.msra.mxu0 %v101
    %434 = vmatpush.msra.mxu0 %v100
    %435 = vmatpush.msra.mxu0 %v99
    %436 = vmatpush.msra.mxu0 %v98
    %437 = vmatpush.msra.mxu0 %v97
    %438 = vmatpush.msra.mxu0 %v96
    %439 = vmatmul.f32.gmra.mxu0 %v311
    %v440 = vpop.f32.mrf.mxu0
    %v441 = vadd.f32 %v421, %v440
    %442 = vdwg.mxu0
    %443 = vmatpush.msra.mxu0 %v127
    %444 = vmatpush.msra.mxu0 %v126
    %445 = vmatpush.msra.mxu0 %v125
    %446 = vmatpush.msra.mxu0 %v124
    %447 = vmatpush.msra.mxu0 %v123
    %448 = vmatpush.msra.mxu0 %v122
    %449 = vmatpush.msra.mxu0 %v121
    %450 = vmatpush.msra.mxu0 %v120
    %451 = vmatpush.msra.mxu0 %v119
    %452 = vmatpush.msra.mxu0 %v118
    %453 = vmatpush.msra.mxu0 %v117
    %454 = vmatpush.msra.mxu0 %v116
    %455 = vmatpush.msra.mxu0 %v115
    %456 = vmatpush.msra.mxu0 %v114
    %457 = vmatpush.msra.mxu0 %v113
    %458 = vmatpush.msra.mxu0 %v112
    %459 = vmatmul.f32.gmra.mxu0 %v312
    %v460 = vpop.f32.mrf.mxu0
    %v461 = vadd.f32 %v441, %v460
    %462 = vdwg.mxu0
    %463 = vmatpush.msra.mxu0 %v143
    %464 = vmatpush.msra.mxu0 %v142
    %465 = vmatpush.msra.mxu0 %v141
    %466 = vmatpush.msra.mxu0 %v140
    %467 = vmatpush.msra.mxu0 %v139
    %468 = vmatpush.msra.mxu0 %v138
    %469 = vmatpush.msra.mxu0 %v137
    %470 = vmatpush.msra.mxu0 %v136
    %471 = vmatpush.msra.mxu0 %v135
    %472 = vmatpush.msra.mxu0 %v134
    %473 = vmatpush.msra.mxu0 %v133
    %474 = vmatpush.msra.mxu0 %v132
    %475 = vmatpush.msra.mxu0 %v131
    %476 = vmatpush.msra.mxu0 %v130
    %477 = vmatpush.msra.mxu0 %v129
    %478 = vmatpush.msra.mxu0 %v128
    %479 = vmatmul.f32.gmra.mxu0 %v313
    %v480 = vpop.f32.mrf.mxu0
    %v481 = vadd.f32 %v461, %v480
    %482 = vdwg.mxu0
    %483 = vmatpush.msra.mxu0 %v159
    %484 = vmatpush.msra.mxu0 %v158
    %485 = vmatpush.msra.mxu0 %v157
    %486 = vmatpush.msra.mxu0 %v156
    %487 = vmatpush.msra.mxu0 %v155
    %488 = vmatpush.msra.mxu0 %v154
    %489 = vmatpush.msra.mxu0 %v153
    %490 = vmatpush.msra.mxu0 %v152
    %491 = vmatpush.msra.mxu0 %v151
    %492 = vmatpush.msra.mxu0 %v150
    %493 = vmatpush.msra.mxu0 %v149
    %494 = vmatpush.msra.mxu0 %v148
    %495 = vmatpush.msra.mxu0 %v147
    %496 = vmatpush.msra.mxu0 %v146
    %497 = vmatpush.msra.mxu0 %v145
    %498 = vmatpush.msra.mxu0 %v144
    %499 = vmatmul.f32.gmra.mxu0 %v314
    %v500 = vpop.f32.mrf.mxu0
    %v501 = vadd.f32 %v481, %v500
    %502 = vdwg.mxu0
    %503 = vmatpush.msra.mxu0 %v175
    %504 = vmatpush.msra.mxu0 %v174
    %505 = vmatpush.msra.mxu0 %v173
    %506 = vmatpush.msra.mxu0 %v172
    %507 = vmatpush.msra.mxu0 %v171
    %508 = vmatpush.msra.mxu0 %v170
    %509 = vmatpush.msra.mxu0 %v169
    %510 = vmatpush.msra.mxu0 %v168
    %511 = vmatpush.msra.mxu0 %v167
    %512 = vmatpush.msra.mxu0 %v166
    %513 = vmatpush.msra.mxu0 %v165
    %514 = vmatpush.msra.mxu0 %v164
    %515 = vmatpush.msra.mxu0 %v163
    %516 = vmatpush.msra.mxu0 %v162
    %517 = vmatpush.msra.mxu0 %v161
    %518 = vmatpush.msra.mxu0 %v160
    %519 = vmatmul.f32.gmra.mxu0 %v319
    %v520 = vpop.f32.mrf.mxu0
    %v521 = vadd.f32 %v501, %v520
    %522 = vdwg.mxu0
    %523 = vmatpush.msra.mxu0 %v191
    %524 = vmatpush.msra.mxu0 %v190
    %525 = vmatpush.msra.mxu0 %v189
    %526 = vmatpush.msra.mxu0 %v188
    %527 = vmatpush.msra.mxu0 %v187
    %528 = vmatpush.msra.mxu0 %v186
    %529 = vmatpush.msra.mxu0 %v185
    %530 = vmatpush.msra.mxu0 %v184
    %531 = vmatpush.msra.mxu0 %v183
    %532 = vmatpush.msra.mxu0 %v182
    %533 = vmatpush.msra.mxu0 %v181
    %534 = vmatpush.msra.mxu0 %v180
    %535 = vmatpush.msra.mxu0 %v179
    %536 = vmatpush.msra.mxu0 %v178
    %537 = vmatpush.msra.mxu0 %v177
    %538 = vmatpush.msra.mxu0 %v176
    %539 = vmatmul.f32.gmra.mxu0 %v320
    %v540 = vpop.f32.mrf.mxu0
    %v541 = vadd.f32 %v521, %v540
    %542 = vdwg.mxu0
    %543 = vmatpush.msra.mxu0 %v207
    %544 = vmatpush.msra.mxu0 %v206
    %545 = vmatpush.msra.mxu0 %v205
    %546 = vmatpush.msra.mxu0 %v204
    %547 = vmatpush.msra.mxu0 %v203
    %548 = vmatpush.msra.mxu0 %v202
    %549 = vmatpush.msra.mxu0 %v201
    %550 = vmatpush.msra.mxu0 %v200
    %551 = vmatpush.msra.mxu0 %v199
    %552 = vmatpush.msra.mxu0 %v198
    %553 = vmatpush.msra.mxu0 %v197
    %554 = vmatpush.msra.mxu0 %v196
    %555 = vmatpush.msra.mxu0 %v195
    %556 = vmatpush.msra.mxu0 %v194
    %557 = vmatpush.msra.mxu0 %v193
    %558 = vmatpush.msra.mxu0 %v192
    %559 = vmatmul.f32.gmra.mxu0 %v321
    %v560 = vpop.f32.mrf.mxu0
    %v561 = vadd.f32 %v541, %v560
    %562 = vdwg.mxu0
    %563 = vmatpush.msra.mxu0 %v223
    %564 = vmatpush.msra.mxu0 %v222
    %565 = vmatpush.msra.mxu0 %v221
    %566 = vmatpush.msra.mxu0 %v220
    %567 = vmatpush.msra.mxu0 %v219
    %568 = vmatpush.msra.mxu0 %v218
    %569 = vmatpush.msra.mxu0 %v217
    %570 = vmatpush.msra.mxu0 %v216
    %571 = vmatpush.msra.mxu0 %v215
    %572 = vmatpush.msra.mxu0 %v214
    %573 = vmatpush.msra.mxu0 %v213
    %574 = vmatpush.msra.mxu0 %v212
    %575 = vmatpush.msra.mxu0 %v211
    %576 = vmatpush.msra.mxu0 %v210
    %577 = vmatpush.msra.mxu0 %v209
    %578 = vmatpush.msra.mxu0 %v208
    %579 = vmatmul.f32.gmra.mxu0 %v322
    %v580 = vpop.f32.mrf.mxu0
    %v581 = vadd.f32 %v561, %v580
    %582 = vdwg.mxu0
    %583 = vmatpush.msra.mxu0 %v239
    %584 = vmatpush.msra.mxu0 %v238
    %585 = vmatpush.msra.mxu0 %v237
    %586 = vmatpush.msra.mxu0 %v236
    %587 = vmatpush.msra.mxu0 %v235
    %588 = vmatpush.msra.mxu0 %v234
    %589 = vmatpush.msra.mxu0 %v233
    %590 = vmatpush.msra.mxu0 %v232
    %591 = vmatpush.msra.mxu0 %v231
    %592 = vmatpush.msra.mxu0 %v230
    %593 = vmatpush.msra.mxu0 %v229
    %594 = vmatpush.msra.mxu0 %v228
    %595 = vmatpush.msra.mxu0 %v227
    %596 = vmatpush.msra.mxu0 %v226
    %597 = vmatpush.msra.mxu0 %v225
    %598 = vmatpush.msra.mxu0 %v224
    %599 = vmatmul.f32.gmra.mxu0 %v323
    %v600 = vpop.f32.mrf.mxu0
    %v601 = vadd.f32 %v581, %v600
    %602 = vdwg.mxu0
    %603 = vmatpush.msra.mxu0 %v255
    %604 = vmatpush.msra.mxu0 %v254
    %605 = vmatpush.msra.mxu0 %v253
    %606 = vmatpush.msra.mxu0 %v252
    %607 = vmatpush.msra.mxu0 %v251
    %608 = vmatpush.msra.mxu0 %v250
    %609 = vmatpush.msra.mxu0 %v249
    %610 = vmatpush.msra.mxu0 %v248
    %611 = vmatpush.msra.mxu0 %v247
    %612 = vmatpush.msra.mxu0 %v246
    %613 = vmatpush.msra.mxu0 %v245
    %614 = vmatpush.msra.mxu0 %v244
    %615 = vmatpush.msra.mxu0 %v243
    %616 = vmatpush.msra.mxu0 %v242
    %617 = vmatpush.msra.mxu0 %v241
    %618 = vmatpush.msra.mxu0 %v240
    %619 = vmatmul.f32.gmra.mxu0 %v324
    %v620 = vpop.f32.mrf.mxu0
    %v621 = vadd.f32 %v601, %v620
    %622 = vdwg.mxu0
    %623 = vmatpush.msra.mxu0 %v271
    %624 = vmatpush.msra.mxu0 %v270
    %625 = vmatpush.msra.mxu0 %v269
    %626 = vmatpush.msra.mxu0 %v268
    %627 = vmatpush.msra.mxu0 %v267
    %628 = vmatpush.msra.mxu0 %v266
    %629 = vmatpush.msra.mxu0 %v265
    %630 = vmatpush.msra.mxu0 %v264
    %631 = vmatpush.msra.mxu0 %v263
    %632 = vmatpush.msra.mxu0 %v262
    %633 = vmatpush.msra.mxu0 %v261
    %634 = vmatpush.msra.mxu0 %v260
    %635 = vmatpush.msra.mxu0 %v259
    %636 = vmatpush.msra.mxu0 %v258
    %637 = vmatpush.msra.mxu0 %v257
    %638 = vmatpush.msra.mxu0 %v256
    %639 = vmatmul.f32.gmra.mxu0 %v325
    %v640 = vpop.f32.mrf.mxu0
    %v641 = vadd.f32 %v621, %v640
    %642 = vdwg.mxu0
    %643 = vmatpush.msra.mxu0 %v287
    %644 = vmatpush.msra.mxu0 %v286
    %645 = vmatpush.msra.mxu0 %v285
    %646 = vmatpush.msra.mxu0 %v284
    %647 = vmatpush.msra.mxu0 %v283
    %648 = vmatpush.msra.mxu0 %v282
    %649 = vmatpush.msra.mxu0 %v281
    %650 = vmatpush.msra.mxu0 %v280
    %651 = vmatpush.msra.mxu0 %v279
    %652 = vmatpush.msra.mxu0 %v278
    %653 = vmatpush.msra.mxu0 %v277
    %654 = vmatpush.msra.mxu0 %v276
    %655 = vmatpush.msra.mxu0 %v275
    %656 = vmatpush.msra.mxu0 %v274
    %657 = vmatpush.msra.mxu0 %v273
    %658 = vmatpush.msra.mxu0 %v272
    %659 = vmatmul.f32.gmra.mxu0 %v326
    %v660 = vpop.f32.mrf.mxu0
    %v661 = vadd.f32 %v641, %v660
    %662 = vdwg.mxu0
    %vm663 = vcmp.ge.f32.partialorder %v661, 0.0
    %v664 = vmul.f32 %v661, 0.01
    %v665 = vsel %vm663, %v661, %v664
    %v666 = vld [vmem:[%s3] sm:$0xff]
    %v667 = vld [vmem:[%s3 + $0x8] sm:$0xff]
    %v668 = vld [vmem:[%s4] sm:$0x1]
    %v670 = vperm.slane %v668, 0
    %vm672 = vcmask 130048
    %v674 = vsel %vm672, %v665, 0
    %676 = vmatpush.msra.mxu0 0.0
    %677 = vmatpush.msra.mxu0 0.0
    %678 = vmatpush.msra.mxu0 0.0
    %679 = vmatpush.msra.mxu0 0.0
    %680 = vmatpush.msra.mxu0 0.0
    %681 = vmatpush.msra.mxu0 0.0
    %682 = vmatpush.msra.mxu0 0.0
    %683 = vmatpush.msra.mxu0 0.0
    %684 = vmatpush.msra.mxu0 0.0
    %685 = vmatpush.msra.mxu0 0.0
    %686 = vmatpush.msra.mxu0 0.0
    %687 = vmatpush.msra.mxu0 0.0
    %688 = vmatpush.msra.mxu0 0.0
    %689 = vmatpush.msra.mxu0 0.0
    %690 = vmatpush.msra.mxu0 %v667
    %691 = vmatpush.msra.mxu0 %v666
    %692 = vmatmul.f32.gmra.mxu0 %v674
    %v693 = vpop.f32.mrf.mxu0
    %v694 = vadd.f32 %v670, %v693
    %695 = vdwg.mxu0
    %vm696 = vcmp.ge.f32.partialorder %v694, 0.0
    %v697 = vmul.f32 %v694, 0.01
    %v698 = vsel %vm696, %v694, %v697
    %v699 = vxor.u32 %v698, 2147483648
    %v700 = vmul.f32 %v699, 1.442695
    %v701 = vpow.pop %v700
    %v702 = vadd.f32 %v701, 1.0
    %v703 = vrcp.pop %v702
    %v704 = vmul.f32 %v702, %v703
    %v705 = vsub.f32 1.0, %v704
    %v706 = vmul.f32 %v703, %v705
    %v707 = vadd.f32 %v703, %v706
    %vm708 = vweird.f32 %v702
    %vm709 = vweird.f32 %v703
    %vm710 = vmor %vm708, %vm709
    %v711 = vsel %vm710, %v703, %v707
    %v712 = vand.u32 2147483647, %v702
    %vm713 = vcmp.eq.f32.partialorder %v712, 8.507059e+37
    %v714 = vand.u32 %v702, 2147483648
    %v715 = vor.u32 1.1754944e-38, %v714
    %v716 = vsel %vm713, %v715, %v711
    %v717 = vmul.f32 1.0, %v716
    %v718 = vld [vmem:[%s5] sm:$0xff]
    %v719 = vld [vmem:[%s5 + $0x8] sm:$0xff]
    %v720 = vld [vmem:[%s5 + $0x10] sm:$0xff]
    %v721 = vld [vmem:[%s5 + $0x18] sm:$0xff]
    %v722 = vld [vmem:[%s5 + $0x20] sm:$0xff]
    %v723 = vld [vmem:[%s5 + $0x28] sm:$0xff]
    %v724 = vld [vmem:[%s5 + $0x30] sm:$0xff]
    %v725 = vld [vmem:[%s5 + $0x38] sm:$0xff]
    %v726 = vld [vmem:[%s5 + $0x40] sm:$0xff]
    %v727 = vld [vmem:[%s5 + $0x48] sm:$0xff]
    %v728 = vld [vmem:[%s5 + $0x50] sm:$0xff]
    %v729 = vld [vmem:[%s5 + $0x58] sm:$0xff]
    %v730 = vld [vmem:[%s5 + $0x60] sm:$0xff]
    %v731 = vld [vmem:[%s5 + $0x68] sm:$0xff]
    %v732 = vld [vmem:[%s5 + $0x70] sm:$0xff]
    %v733 = vld [vmem:[%s5 + $0x78] sm:$0xff]
    %v734 = vld [vmem:[%s5 + $0x80] sm:$0xff]
    %v735 = vld [vmem:[%s5 + $0x88] sm:$0xff]
    %v736 = vld [vmem:[%s5 + $0x90] sm:$0xff]
    %v737 = vld [vmem:[%s5 + $0x98] sm:$0xff]
    %v738 = vld [vmem:[%s5 + $0xa0] sm:$0xff]
    %v739 = vld [vmem:[%s5 + $0xa8] sm:$0xff]
    %v740 = vld [vmem:[%s5 + $0xb0] sm:$0xff]
    %v741 = vld [vmem:[%s5 + $0xb8] sm:$0xff]
    %v742 = vld [vmem:[%s5 + $0xc0] sm:$0xff]
    %v743 = vld [vmem:[%s5 + $0xc8] sm:$0xff]
    %v744 = vld [vmem:[%s5 + $0xd0] sm:$0xff]
    %v745 = vld [vmem:[%s5 + $0xd8] sm:$0xff]
    %v746 = vld [vmem:[%s5 + $0xe0] sm:$0xff]
    %v747 = vld [vmem:[%s5 + $0xe8] sm:$0xff]
    %v748 = vld [vmem:[%s5 + $0xf0] sm:$0xff]
    %v749 = vld [vmem:[%s5 + $0xf8] sm:$0xff]
    %v750 = vld [vmem:[%s5 + $0x100] sm:$0xff]
    %v751 = vld [vmem:[%s5 + $0x108] sm:$0xff]
    %v752 = vld [vmem:[%s5 + $0x110] sm:$0xff]
    %v753 = vld [vmem:[%s5 + $0x118] sm:$0xff]
    %v754 = vld [vmem:[%s5 + $0x120] sm:$0xff]
    %v755 = vld [vmem:[%s5 + $0x128] sm:$0xff]
    %v756 = vld [vmem:[%s5 + $0x130] sm:$0xff]
    %v757 = vld [vmem:[%s5 + $0x138] sm:$0xff]
    %v758 = vld [vmem:[%s5 + $0x140] sm:$0xff]
    %v759 = vld [vmem:[%s5 + $0x148] sm:$0xff]
    %v760 = vld [vmem:[%s5 + $0x150] sm:$0xff]
    %v761 = vld [vmem:[%s5 + $0x158] sm:$0xff]
    %v762 = vld [vmem:[%s5 + $0x160] sm:$0xff]
    %v763 = vld [vmem:[%s5 + $0x168] sm:$0xff]
    %v764 = vld [vmem:[%s5 + $0x170] sm:$0xff]
    %v765 = vld [vmem:[%s5 + $0x178] sm:$0xff]
    %v766 = vld [vmem:[%s5 + $0x180] sm:$0xff]
    %v767 = vld [vmem:[%s5 + $0x188] sm:$0xff]
    %v768 = vld [vmem:[%s5 + $0x190] sm:$0xff]
    %v769 = vld [vmem:[%s5 + $0x198] sm:$0xff]
    %v770 = vld [vmem:[%s5 + $0x1a0] sm:$0xff]
    %v771 = vld [vmem:[%s5 + $0x1a8] sm:$0xff]
    %v772 = vld [vmem:[%s5 + $0x1b0] sm:$0xff]
    %v773 = vld [vmem:[%s5 + $0x1b8] sm:$0xff]
    %v774 = vld [vmem:[%s5 + $0x1c0] sm:$0xff]
    %v775 = vld [vmem:[%s5 + $0x1c8] sm:$0xff]
    %v776 = vld [vmem:[%s5 + $0x1d0] sm:$0xff]
    %v777 = vld [vmem:[%s5 + $0x1d8] sm:$0xff]
    %v778 = vld [vmem:[%s5 + $0x1e0] sm:$0xff]
    %v779 = vld [vmem:[%s5 + $0x1e8] sm:$0xff]
    %v780 = vld [vmem:[%s5 + $0x1f0] sm:$0xff]
    %v781 = vld [vmem:[%s5 + $0x1f8] sm:$0xff]
    %vm782 = vcmask 261120
    %v784 = vsel %vm782, %v717, 0
    %786 = vmatpush.msra.mxu0 0.0
    %787 = vmatpush.msra.mxu0 0.0
    %788 = vmatpush.msra.mxu0 0.0
    %789 = vmatpush.msra.mxu0 0.0
    %790 = vmatpush.msra.mxu0 0.0
    %791 = vmatpush.msra.mxu0 0.0
    %792 = vmatpush.msra.mxu0 0.0
    %793 = vmatpush.msra.mxu0 0.0
    %794 = vmatpush.msra.mxu0 0.0
    %795 = vmatpush.msra.mxu0 0.0
    %796 = vmatpush.msra.mxu0 0.0
    %797 = vmatpush.msra.mxu0 0.0
    %798 = vmatpush.msra.mxu0 %v766
    %799 = vmatpush.msra.mxu0 %v750
    %800 = vmatpush.msra.mxu0 %v734
    %801 = vmatpush.msra.mxu0 %v718
    %802 = vmatmul.f32.gmra.mxu0 %v784
    %v803 = vpop.f32.mrf.mxu0
    %v804 = vadd.f32 0.0, %v803
    %805 = vdwg.mxu0
    %806 = vmatpush.msra.mxu0 0.0
    %807 = vmatpush.msra.mxu0 0.0
    %808 = vmatpush.msra.mxu0 0.0
    %809 = vmatpush.msra.mxu0 0.0
    %810 = vmatpush.msra.mxu0 0.0
    %811 = vmatpush.msra.mxu0 0.0
    %812 = vmatpush.msra.mxu0 0.0
    %813 = vmatpush.msra.mxu0 0.0
    %814 = vmatpush.msra.mxu0 0.0
    %815 = vmatpush.msra.mxu0 0.0
    %816 = vmatpush.msra.mxu0 0.0
    %817 = vmatpush.msra.mxu0 0.0
    %818 = vmatpush.msra.mxu0 %v767
    %819 = vmatpush.msra.mxu0 %v751
    %820 = vmatpush.msra.mxu0 %v735
    %821 = vmatpush.msra.mxu0 %v719
    %822 = vmatmul.f32.gmra.mxu0 %v784
    %v823 = vpop.f32.mrf.mxu0
    %v824 = vadd.f32 0.0, %v823
    %825 = vdwg.mxu0
    %826 = vmatpush.msra.mxu0 0.0
    %827 = vmatpush.msra.mxu0 0.0
    %828 = vmatpush.msra.mxu0 0.0
    %829 = vmatpush.msra.mxu0 0.0
    %830 = vmatpush.msra.mxu0 0.0
    %831 = vmatpush.msra.mxu0 0.0
    %832 = vmatpush.msra.mxu0 0.0
    %833 = vmatpush.msra.mxu0 0.0
    %834 = vmatpush.msra.mxu0 0.0
    %835 = vmatpush.msra.mxu0 0.0
    %836 = vmatpush.msra.mxu0 0.0
    %837 = vmatpush.msra.mxu0 0.0
    %838 = vmatpush.msra.mxu0 %v768
    %839 = vmatpush.msra.mxu0 %v752
    %840 = vmatpush.msra.mxu0 %v736
    %841 = vmatpush.msra.mxu0 %v720
    %842 = vmatmul.f32.gmra.mxu0 %v784
    %v843 = vpop.f32.mrf.mxu0
    %v844 = vadd.f32 0.0, %v843
    %845 = vdwg.mxu0
    %846 = vmatpush.msra.mxu0 0.0
    %847 = vmatpush.msra.mxu0 0.0
    %848 = vmatpush.msra.mxu0 0.0
    %849 = vmatpush.msra.mxu0 0.0
    %850 = vmatpush.msra.mxu0 0.0
    %851 = vmatpush.msra.mxu0 0.0
    %852 = vmatpush.msra.mxu0 0.0
    %853 = vmatpush.msra.mxu0 0.0
    %854 = vmatpush.msra.mxu0 0.0
    %855 = vmatpush.msra.mxu0 0.0
    %856 = vmatpush.msra.mxu0 0.0
    %857 = vmatpush.msra.mxu0 0.0
    %858 = vmatpush.msra.mxu0 %v769
    %859 = vmatpush.msra.mxu0 %v753
    %860 = vmatpush.msra.mxu0 %v737
    %861 = vmatpush.msra.mxu0 %v721
    %862 = vmatmul.f32.gmra.mxu0 %v784
    %v863 = vpop.f32.mrf.mxu0
    %v864 = vadd.f32 0.0, %v863
    %865 = vdwg.mxu0
    %866 = vmatpush.msra.mxu0 0.0
    %867 = vmatpush.msra.mxu0 0.0
    %868 = vmatpush.msra.mxu0 0.0
    %869 = vmatpush.msra.mxu0 0.0
    %870 = vmatpush.msra.mxu0 0.0
    %871 = vmatpush.msra.mxu0 0.0
    %872 = vmatpush.msra.mxu0 0.0
    %873 = vmatpush.msra.mxu0 0.0
    %874 = vmatpush.msra.mxu0 0.0
    %875 = vmatpush.msra.mxu0 0.0
    %876 = vmatpush.msra.mxu0 0.0
    %877 = vmatpush.msra.mxu0 0.0
    %878 = vmatpush.msra.mxu0 %v770
    %879 = vmatpush.msra.mxu0 %v754
    %880 = vmatpush.msra.mxu0 %v738
    %881 = vmatpush.msra.mxu0 %v722
    %882 = vmatmul.f32.gmra.mxu0 %v784
    %v883 = vpop.f32.mrf.mxu0
    %v884 = vadd.f32 0.0, %v883
    %885 = vdwg.mxu0
    %886 = vmatpush.msra.mxu0 0.0
    %887 = vmatpush.msra.mxu0 0.0
    %888 = vmatpush.msra.mxu0 0.0
    %889 = vmatpush.msra.mxu0 0.0
    %890 = vmatpush.msra.mxu0 0.0
    %891 = vmatpush.msra.mxu0 0.0
    %892 = vmatpush.msra.mxu0 0.0
    %893 = vmatpush.msra.mxu0 0.0
    %894 = vmatpush.msra.mxu0 0.0
    %895 = vmatpush.msra.mxu0 0.0
    %896 = vmatpush.msra.mxu0 0.0
    %897 = vmatpush.msra.mxu0 0.0
    %898 = vmatpush.msra.mxu0 %v771
    %899 = vmatpush.msra.mxu0 %v755
    %900 = vmatpush.msra.mxu0 %v739
    %901 = vmatpush.msra.mxu0 %v723
    %902 = vmatmul.f32.gmra.mxu0 %v784
    %v903 = vpop.f32.mrf.mxu0
    %v904 = vadd.f32 0.0, %v903
    %905 = vdwg.mxu0
    %906 = vmatpush.msra.mxu0 0.0
    %907 = vmatpush.msra.mxu0 0.0
    %908 = vmatpush.msra.mxu0 0.0
    %909 = vmatpush.msra.mxu0 0.0
    %910 = vmatpush.msra.mxu0 0.0
    %911 = vmatpush.msra.mxu0 0.0
    %912 = vmatpush.msra.mxu0 0.0
    %913 = vmatpush.msra.mxu0 0.0
    %914 = vmatpush.msra.mxu0 0.0
    %915 = vmatpush.msra.mxu0 0.0
    %916 = vmatpush.msra.mxu0 0.0
    %917 = vmatpush.msra.mxu0 0.0
    %918 = vmatpush.msra.mxu0 %v772
    %919 = vmatpush.msra.mxu0 %v756
    %920 = vmatpush.msra.mxu0 %v740
    %921 = vmatpush.msra.mxu0 %v724
    %922 = vmatmul.f32.gmra.mxu0 %v784
    %v923 = vpop.f32.mrf.mxu0
    %v924 = vadd.f32 0.0, %v923
    %925 = vdwg.mxu0
    %926 = vmatpush.msra.mxu0 0.0
    %927 = vmatpush.msra.mxu0 0.0
    %928 = vmatpush.msra.mxu0 0.0
    %929 = vmatpush.msra.mxu0 0.0
    %930 = vmatpush.msra.mxu0 0.0
    %931 = vmatpush.msra.mxu0 0.0
    %932 = vmatpush.msra.mxu0 0.0
    %933 = vmatpush.msra.mxu0 0.0
    %934 = vmatpush.msra.mxu0 0.0
    %935 = vmatpush.msra.mxu0 0.0
    %936 = vmatpush.msra.mxu0 0.0
    %937 = vmatpush.msra.mxu0 0.0
    %938 = vmatpush.msra.mxu0 %v773
    %939 = vmatpush.msra.mxu0 %v757
    %940 = vmatpush.msra.mxu0 %v741
    %941 = vmatpush.msra.mxu0 %v725
    %942 = vmatmul.f32.gmra.mxu0 %v784
    %v943 = vpop.f32.mrf.mxu0
    %v944 = vadd.f32 0.0, %v943
    %945 = vdwg.mxu0
    %946 = vmatpush.msra.mxu0 0.0
    %947 = vmatpush.msra.mxu0 0.0
    %948 = vmatpush.msra.mxu0 0.0
    %949 = vmatpush.msra.mxu0 0.0
    %950 = vmatpush.msra.mxu0 0.0
    %951 = vmatpush.msra.mxu0 0.0
    %952 = vmatpush.msra.mxu0 0.0
    %953 = vmatpush.msra.mxu0 0.0
    %954 = vmatpush.msra.mxu0 0.0
    %955 = vmatpush.msra.mxu0 0.0
    %956 = vmatpush.msra.mxu0 0.0
    %957 = vmatpush.msra.mxu0 0.0
    %958 = vmatpush.msra.mxu0 %v774
    %959 = vmatpush.msra.mxu0 %v758
    %960 = vmatpush.msra.mxu0 %v742
    %961 = vmatpush.msra.mxu0 %v726
    %962 = vmatmul.f32.gmra.mxu0 %v784
    %v963 = vpop.f32.mrf.mxu0
    %v964 = vadd.f32 0.0, %v963
    %965 = vdwg.mxu0
    %966 = vmatpush.msra.mxu0 0.0
    %967 = vmatpush.msra.mxu0 0.0
    %968 = vmatpush.msra.mxu0 0.0
    %969 = vmatpush.msra.mxu0 0.0
    %970 = vmatpush.msra.mxu0 0.0
    %971 = vmatpush.msra.mxu0 0.0
    %972 = vmatpush.msra.mxu0 0.0
    %973 = vmatpush.msra.mxu0 0.0
    %974 = vmatpush.msra.mxu0 0.0
    %975 = vmatpush.msra.mxu0 0.0
    %976 = vmatpush.msra.mxu0 0.0
    %977 = vmatpush.msra.mxu0 0.0
    %978 = vmatpush.msra.mxu0 %v775
    %979 = vmatpush.msra.mxu0 %v759
    %980 = vmatpush.msra.mxu0 %v743
    %981 = vmatpush.msra.mxu0 %v727
    %982 = vmatmul.f32.gmra.mxu0 %v784
    %v983 = vpop.f32.mrf.mxu0
    %v984 = vadd.f32 0.0, %v983
    %985 = vdwg.mxu0
    %986 = vmatpush.msra.mxu0 0.0
    %987 = vmatpush.msra.mxu0 0.0
    %988 = vmatpush.msra.mxu0 0.0
    %989 = vmatpush.msra.mxu0 0.0
    %990 = vmatpush.msra.mxu0 0.0
    %991 = vmatpush.msra.mxu0 0.0
    %992 = vmatpush.msra.mxu0 0.0
    %993 = vmatpush.msra.mxu0 0.0
    %994 = vmatpush.msra.mxu0 0.0
    %995 = vmatpush.msra.mxu0 0.0
    %996 = vmatpush.msra.mxu0 0.0
    %997 = vmatpush.msra.mxu0 0.0
    %998 = vmatpush.msra.mxu0 %v776
    %999 = vmatpush.msra.mxu0 %v760
    %1000 = vmatpush.msra.mxu0 %v744
    %1001 = vmatpush.msra.mxu0 %v728
    %1002 = vmatmul.f32.gmra.mxu0 %v784
    %v1003 = vpop.f32.mrf.mxu0
    %v1004 = vadd.f32 0.0, %v1003
    %1005 = vdwg.mxu0
    %1006 = vmatpush.msra.mxu0 0.0
    %1007 = vmatpush.msra.mxu0 0.0
    %1008 = vmatpush.msra.mxu0 0.0
    %1009 = vmatpush.msra.mxu0 0.0
    %1010 = vmatpush.msra.mxu0 0.0
    %1011 = vmatpush.msra.mxu0 0.0
    %1012 = vmatpush.msra.mxu0 0.0
    %1013 = vmatpush.msra.mxu0 0.0
    %1014 = vmatpush.msra.mxu0 0.0
    %1015 = vmatpush.msra.mxu0 0.0
    %1016 = vmatpush.msra.mxu0 0.0
    %1017 = vmatpush.msra.mxu0 0.0
    %1018 = vmatpush.msra.mxu0 %v777
    %1019 = vmatpush.msra.mxu0 %v761
    %1020 = vmatpush.msra.mxu0 %v745
    %1021 = vmatpush.msra.mxu0 %v729
    %1022 = vmatmul.f32.gmra.mxu0 %v784
    %v1023 = vpop.f32.mrf.mxu0
    %v1024 = vadd.f32 0.0, %v1023
    %1025 = vdwg.mxu0
    %1026 = vmatpush.msra.mxu0 0.0
    %1027 = vmatpush.msra.mxu0 0.0
    %1028 = vmatpush.msra.mxu0 0.0
    %1029 = vmatpush.msra.mxu0 0.0
    %1030 = vmatpush.msra.mxu0 0.0
    %1031 = vmatpush.msra.mxu0 0.0
    %1032 = vmatpush.msra.mxu0 0.0
    %1033 = vmatpush.msra.mxu0 0.0
    %1034 = vmatpush.msra.mxu0 0.0
    %1035 = vmatpush.msra.mxu0 0.0
    %1036 = vmatpush.msra.mxu0 0.0
    %1037 = vmatpush.msra.mxu0 0.0
    %1038 = vmatpush.msra.mxu0 %v778
    %1039 = vmatpush.msra.mxu0 %v762
    %1040 = vmatpush.msra.mxu0 %v746
    %1041 = vmatpush.msra.mxu0 %v730
    %1042 = vmatmul.f32.gmra.mxu0 %v784
    %v1043 = vpop.f32.mrf.mxu0
    %v1044 = vadd.f32 0.0, %v1043
    %1045 = vdwg.mxu0
    %1046 = vmatpush.msra.mxu0 0.0
    %1047 = vmatpush.msra.mxu0 0.0
    %1048 = vmatpush.msra.mxu0 0.0
    %1049 = vmatpush.msra.mxu0 0.0
    %1050 = vmatpush.msra.mxu0 0.0
    %1051 = vmatpush.msra.mxu0 0.0
    %1052 = vmatpush.msra.mxu0 0.0
    %1053 = vmatpush.msra.mxu0 0.0
    %1054 = vmatpush.msra.mxu0 0.0
    %1055 = vmatpush.msra.mxu0 0.0
    %1056 = vmatpush.msra.mxu0 0.0
    %1057 = vmatpush.msra.mxu0 0.0
    %1058 = vmatpush.msra.mxu0 %v779
    %1059 = vmatpush.msra.mxu0 %v763
    %1060 = vmatpush.msra.mxu0 %v747
    %1061 = vmatpush.msra.mxu0 %v731
    %1062 = vmatmul.f32.gmra.mxu0 %v784
    %v1063 = vpop.f32.mrf.mxu0
    %v1064 = vadd.f32 0.0, %v1063
    %1065 = vdwg.mxu0
    %1066 = vmatpush.msra.mxu0 0.0
    %1067 = vmatpush.msra.mxu0 0.0
    %1068 = vmatpush.msra.mxu0 0.0
    %1069 = vmatpush.msra.mxu0 0.0
    %1070 = vmatpush.msra.mxu0 0.0
    %1071 = vmatpush.msra.mxu0 0.0
    %1072 = vmatpush.msra.mxu0 0.0
    %1073 = vmatpush.msra.mxu0 0.0
    %1074 = vmatpush.msra.mxu0 0.0
    %1075 = vmatpush.msra.mxu0 0.0
    %1076 = vmatpush.msra.mxu0 0.0
    %1077 = vmatpush.msra.mxu0 0.0
    %1078 = vmatpush.msra.mxu0 %v780
    %1079 = vmatpush.msra.mxu0 %v764
    %1080 = vmatpush.msra.mxu0 %v748
    %1081 = vmatpush.msra.mxu0 %v732
    %1082 = vmatmul.f32.gmra.mxu0 %v784
    %v1083 = vpop.f32.mrf.mxu0
    %v1084 = vadd.f32 0.0, %v1083
    %1085 = vdwg.mxu0
    %1086 = vmatpush.msra.mxu0 0.0
    %1087 = vmatpush.msra.mxu0 0.0
    %1088 = vmatpush.msra.mxu0 0.0
    %1089 = vmatpush.msra.mxu0 0.0
    %1090 = vmatpush.msra.mxu0 0.0
    %1091 = vmatpush.msra.mxu0 0.0
    %1092 = vmatpush.msra.mxu0 0.0
    %1093 = vmatpush.msra.mxu0 0.0
    %1094 = vmatpush.msra.mxu0 0.0
    %1095 = vmatpush.msra.mxu0 0.0
    %1096 = vmatpush.msra.mxu0 0.0
    %1097 = vmatpush.msra.mxu0 0.0
    %1098 = vmatpush.msra.mxu0 %v781
    %1099 = vmatpush.msra.mxu0 %v765
    %1100 = vmatpush.msra.mxu0 %v749
    %1101 = vmatpush.msra.mxu0 %v733
    %1102 = vmatmul.f32.gmra.mxu0 %v784
    %v1103 = vpop.f32.mrf.mxu0
    %v1104 = vadd.f32 0.0, %v1103
    %1105 = vdwg.mxu0
    %v1122 = vrot.slane %v824, 4
    %v1123 = vrot.slane %v864, 4
    %v1124 = vrot.slane %v904, 4
    %v1125 = vrot.slane %v944, 4
    %v1126 = vrot.slane %v984, 4
    %v1127 = vrot.slane %v1024, 4
    %v1128 = vrot.slane %v1064, 4
    %v1129 = vrot.slane %v1104, 4
    %vm1130 = vcmask 1043456
    %v1131 = vsel %vm1130, %v804, %v1122
    %v1132 = vsel %vm1130, %v844, %v1123
    %v1133 = vsel %vm1130, %v884, %v1124
    %v1134 = vsel %vm1130, %v924, %v1125
    %v1135 = vsel %vm1130, %v964, %v1126
    %v1136 = vsel %vm1130, %v1004, %v1127
    %v1137 = vsel %vm1130, %v1044, %v1128
    %v1138 = vsel %vm1130, %v1084, %v1129
    %v1147 = vmul.f32 %v24, %v1131
    %v1148 = vmul.f32 %v25, %v1132
    %v1149 = vmul.f32 %v26, %v1133
    %v1150 = vmul.f32 %v27, %v1134
    %v1151 = vmul.f32 %v28, %v1135
    %v1152 = vmul.f32 %v29, %v1136
    %v1153 = vmul.f32 %v30, %v1137
    %v1154 = vmul.f32 %v31, %v1138
    %1155 = vst [vmem:[#allocation2] sm:$0xff] %v1147
    %1156 = vst [vmem:[#allocation2 + $0x8] sm:$0xff] %v1148
    %1157 = vst [vmem:[#allocation2 + $0x10] sm:$0xff] %v1149
    %1158 = vst [vmem:[#allocation2 + $0x18] sm:$0xff] %v1150
    %1159 = vst [vmem:[#allocation2 + $0x20] sm:$0xff] %v1151
    %1160 = vst [vmem:[#allocation2 + $0x28] sm:$0xff] %v1152
    %1161 = vst [vmem:[#allocation2 + $0x30] sm:$0xff] %v1153
    %1162 = vst [vmem:[#allocation2 + $0x38] sm:$0xff] %v1154
    // Predicated region
    $region26: #{tpu_custom_call.1} parent=1 // pred_check
      _
    $region27: #{tpu_custom_call.1} parent=1 // pred_check_branch
      %1164 = sbr.rel (0) target = $region29
    $region28: #{tpu_custom_call.1} parent=1 // pred_region
      %1166 = vsyncadd [#allocation3], 0
      %s1168 = sshll.u32 [#allocation2], 4
      %s1169 = int_to_ptr.vmem [resolvable:$true] %s1168
      %s1170 = sshll.u32 %s6, 4
      %s1171 = int_to_ptr.hbm [resolvable:$true] %s1170
      %1173 = dma.vmem_to_hbm [thread:$0]  %s1169, 1024, %s1171, [#allocation3]
    $region29: #{tpu_custom_call.1} parent=1 // pred_fallthru
      _
    // Predicated region
    $region30: #{tpu_custom_call.1} parent=1 // pred_check
      _
    $region31: #{tpu_custom_call.1} parent=1 // pred_check_branch
      %1175 = sbr.rel (0) target = $region33
    $region32: #{tpu_custom_call.1} parent=1 // pred_region
      %1177 = dma.done [#allocation3], 1024
    $region33: #{tpu_custom_call.1} parent=1 // pred_fallthru
      _
    %1178 = vsyncpa [#allocation3], 1

</llo_original>
